<compile_context>
chip_gen: v5e
topology: v5e:2x2
jax: 0.10.0
libtpu: 0.0.40
codegen_flags: <defaults>
</compile_context>

<pallas_src>
import functools

import jax
import jax.numpy as jnp
from jax.experimental import pallas as pl
from jax.experimental.pallas import tpu as pltpu


def _tree_fold(x, out_cols):
    """Tree-sum an (8, T) array into (8, out_cols); T % out_cols == 0."""
    t = x.shape[-1]
    if t == out_cols:
        return x
    parts = [x[:, j * out_cols:(j + 1) * out_cols] for j in range(t // out_cols)]
    while len(parts) > 1:
        nxt = [parts[i] + parts[i + 1] for i in range(0, len(parts) - 1, 2)]
        if len(parts) % 2:
            nxt.append(parts[-1])
        parts = nxt
    return parts[0]


def _focal_loss_kernel(*refs, c, gamma, has_weight, hw_valid, hw8_total,
                       tile8, out_cols, mask_cols, mask_rows):
    # logits_ref : (1, C, 8, T8)   targets_ref : (1, 1, T8-block) -> (8, T8)
    # weight_ref : (C,) f32 in SMEM (only when has_weight)
    # out_ref    : (1, 1, 8, out_cols) f32 partial sums
    if has_weight:
        logits_ref, targets_ref, weight_ref, out_ref = refs
    else:
        logits_ref, targets_ref, out_ref = refs
        weight_ref = None

    tgt = targets_ref[0, 0]                                   # (8, T8) int32
    shp = tgt.shape

    # Class-axis max: pure VPU elementwise across C (8, T8) slabs.
    mx = logits_ref[0, 0].astype(jnp.float32)
    for k in range(1, c):
        mx = jnp.maximum(mx, logits_ref[0, k].astype(jnp.float32))

    # One pass over classes: sum of exp (EUP), target-logit gather and
    # target-class-weight gather via selects (no onehot materialization).
    l0 = logits_ref[0, 0].astype(jnp.float32)
    sel0 = tgt == 0
    sumexp = jnp.exp(l0 - mx)
    logit_t = jnp.where(sel0, l0, 0.0)
    w_t = jnp.where(sel0, weight_ref[0], 0.0) if has_weight else None
    for k in range(1, c):
        lk = logits_ref[0, k].astype(jnp.float32)
        sumexp = sumexp + jnp.exp(lk - mx)
        sel = tgt == k
        logit_t = logit_t + jnp.where(sel, lk, 0.0)
        if has_weight:
            w_t = w_t + jnp.where(sel, weight_ref[k], 0.0)

    lse = jnp.log(sumexp) + mx
    ce = lse - logit_t                                        # cross entropy
    bce = w_t * ce if has_weight else ce
    pt = jnp.exp(-bce)
    omp = 1.0 - pt

    # (1 - pt) ** gamma: integer gamma -> multiply chain (no EUP traffic);
    # otherwise exp(gamma * log(max(x, 0))) (clamp guards a slightly-negative
    # omp from producing NaN).
    gi = int(gamma)
    if float(gamma) == float(gi) and 0 <= gi <= 8:
        if gi == 0:
            factor = jnp.ones_like(omp)
        else:
            factor = omp
            for _ in range(gi - 1):
                factor = factor * omp
    else:
        factor = jnp.exp(gamma * jnp.log(jnp.maximum(omp, 0.0)))

    # alpha is folded into the wrapper-side scale.
    f_loss = factor * bce                                     # (8, T8)

    if mask_cols or mask_rows:
        s = pl.program_id(1)
        is_last = s == pl.num_programs(1) - 1

        @pl.when(jnp.logical_not(is_last))
        def _():
            out_ref[0, 0] = _tree_fold(f_loss, out_cols)

        @pl.when(is_last)                    # only the last tile pays for the mask
        def _():
            col = jax.lax.broadcasted_iota(jnp.int32, shp, 1) + s * tile8
            valid = None
            if mask_cols:      # ragged last block (cdiv grid, no HBM pad copy)
                valid = col < hw8_total
            if mask_rows:      # HW % 8 != 0 tail padding
                row = jax.lax.broadcasted_iota(jnp.int32, shp, 0)
                rmask = row * hw8_total + col < hw_valid
                valid = rmask if valid is None else jnp.logical_and(valid, rmask)
            out_ref[0, 0] = _tree_fold(jnp.where(valid, f_loss, 0.0), out_cols)
    else:
        out_ref[0, 0] = _tree_fold(f_loss, out_cols)


def focal_loss(inputs, targets, weight=None, alpha=0.25, gamma=2.0,
               tile_hw=None, vmem_limit_bytes=None):
    """inputs: (N, C, H, W) float logits; targets: (N, H, W) int class ids.

    Implements the module's reduction='mean' (its default).
    """
    n, c, h, w_sp = inputs.shape
    hw = h * w_sp

    # --- layout: spatial axis split onto (8 sublanes, hw/8 lanes) -----------
    logits3 = inputs.reshape(n, c, hw)          # free, contiguity-preserving
    tgt3 = targets.reshape(n, 1, hw).astype(jnp.int32)
    pad8 = (-hw) % 8
    if pad8:
        # Rare path (HW not a multiple of 8): pad to a multiple of 8 so the
        # sublane reshape is legal; the padded tail is masked in-kernel.
        logits3 = jnp.pad(logits3, ((0, 0), (0, 0), (0, pad8)))
        tgt3 = jnp.pad(tgt3, ((0, 0), (0, 0), (0, pad8)))
    hw8 = (hw + pad8) // 8
    logits4 = logits3.reshape(n, c, 8, hw8)
    tgt4 = tgt3.reshape(n, 1, 8, hw8)

    has_weight = weight is not None
    if has_weight:
        weight_arr = jnp.asarray(weight, dtype=jnp.float32).reshape(c)

    # --- tile selection (VMEM-budget and generation aware) ------------------
    in_bytes = jnp.dtype(inputs.dtype).itemsize
    col_hbm_bytes = 8 * (c * in_bytes + 4)             # HBM bytes per lane column
    col_vmem_bytes = 2 * col_hbm_bytes + 8 * 4 * 12    # dbl-buffered in + f32 temps
    try:
        info = pltpu.get_tpu_info()
        vmem_cap = int(getattr(info, "vmem_capacity_bytes", 64 * 1024 * 1024))
    except Exception:
        vmem_cap = 64 * 1024 * 1024                    # conservative (v7x per-TC)
    budget = min(vmem_cap // 2, 24 * 1024 * 1024)      # headroom under scoped limit

    if tile_hw is None:
        tile8 = min(8192, max(128, budget // col_vmem_bytes))   # up to 64K spatial/step
    else:
        tile8 = max(8, int(tile_hw) // 8)
        tile8 = min(tile8, max(128, budget // col_vmem_bytes))  # VMEM clamp
    if tile8 >= hw8:
        tile8 = hw8
        if n == 1 and hw8 >= 256:
            # keep >= 2 parallel grid steps so both v7x TensorCores get work
            tile8 = pl.cdiv(pl.cdiv(hw8, 2), 128) * 128
    else:
        tile8 = max(128, (tile8 // 128) * 128)
        if tile8 >= hw8:
            tile8 = hw8
    num_tiles = pl.cdiv(hw8, tile8)

    out_cols = 128 if tile8 % 128 == 0 else tile8
    mask_cols = (hw8 % tile8) != 0          # ragged last block (no HBM pad copy)
    mask_rows = pad8 != 0

    if vmem_limit_bytes is None:
        footprint = tile8 * col_vmem_bytes + (1 << 20)
        vmem_limit_bytes = int(min(vmem_cap, max(32 * 1024 * 1024, 2 * footprint)))

    kernel = functools.partial(
        _focal_loss_kernel, c=c, gamma=float(gamma), has_weight=has_weight,
        hw_valid=hw, hw8_total=hw8, tile8=tile8, out_cols=out_cols,
        mask_cols=mask_cols, mask_rows=mask_rows)

    in_specs = [
        pl.BlockSpec((1, c, 8, tile8), lambda b, s: (b, 0, 0, s)),   # logits
        pl.BlockSpec((1, 1, 8, tile8), lambda b, s: (b, 0, 0, s)),   # targets
    ]
    operands = [logits4, tgt4]
    if has_weight:
        in_specs.append(pl.BlockSpec((c,), lambda b, s: (0,),
                                     memory_space=pltpu.MemorySpace.SMEM))
        operands.append(weight_arr)

    partials = pl.pallas_call(
        kernel,
        out_shape=jax.ShapeDtypeStruct((n, num_tiles, 8, out_cols), jnp.float32),
        grid_spec=pltpu.PrefetchScalarGridSpec(
            num_scalar_prefetch=0,
            grid=(n, num_tiles),
            in_specs=in_specs,
            out_specs=pl.BlockSpec((1, 1, 8, out_cols),
                                   lambda b, s: (b, s, 0, 0)),
        ),
        compiler_params=pltpu.CompilerParams(
            dimension_semantics=("parallel", "parallel"),
            vmem_limit_bytes=vmem_limit_bytes),
    )(*operands)

    # Final reduction + mean (alpha folded in here).
    total = jnp.sum(partials)
    # TODO(synk): reduction='none'/'sum' variants of the module are not wired up
    # (the module default 'mean' is implemented).
    return jnp.float32(alpha) * total / jnp.float32(n * hw)


def _reference_focal_loss(inputs, targets, weight, alpha, gamma):
    # pure-JAX reference mirroring the torch module's semantics
    logits = jnp.transpose(inputs, (0, 2, 3, 1)).reshape(-1, inputs.shape[1])
    t = targets.reshape(-1)
    logp = jax.nn.log_softmax(logits, axis=-1)
    ce = -jnp.take_along_axis(logp, t[:, None], axis=-1)[:, 0]
    if weight is not None:
        ce = weight[t] * ce
    pt = jnp.exp(-ce)
    return jnp.mean(alpha * (1.0 - pt) ** gamma * ce)


if __name__ == "__main__":
    root = jax.random.PRNGKey(0)

    def check(key, shape, weight, alpha, gamma, **kw):
        n, c, hh, ww = shape
        k1, k2 = jax.random.split(key)
        inp = jax.random.normal(k1, shape, dtype=jnp.float32)
        tgt = jax.random.randint(k2, (n, hh, ww), 0, c, dtype=jnp.int32)
        out = jax.block_until_ready(
            focal_loss(inp, tgt, weight=weight, alpha=alpha, gamma=gamma, **kw))
        ref = _reference_focal_loss(inp, tgt, weight, alpha, gamma)
        assert jnp.allclose(out, ref, rtol=1e-5, atol=1e-6), (shape, out, ref)

    k1, k2, k3, k4 = jax.random.split(root, 4)

    # 1) weighted, integer gamma (module defaults, aligned spatial dim)
    check(k1, (2, 4, 16, 16),
          jnp.linspace(0.5, 1.5, 4, dtype=jnp.float32), 0.25, 2.0)
    # 2) unweighted, non-integer gamma (exercises the clamped pow path)
    check(k2, (2, 4, 16, 16), None, 0.5, 1.5)
    # 3) HW % 8 != 0 (exercises the row/flat-index mask path)
    check(k3, (2, 3, 5, 7),
          jnp.array([1.0, 0.7, 1.3], dtype=jnp.float32), 0.25, 2.0)
    # 4) forced spatial tiling with ragged last block (cdiv grid, no HBM pad)
    check(k4, (1, 4, 20, 80), None, 0.25, 2.0, tile_hw=1024)

    print("KERNEL_OK")
</pallas_src>

<mosaic_0001>
module attributes {stable_mosaic.version = 11 : i64} {
  func.func @_focal_loss_kernel(%arg0: i32, %arg1: i32, %arg2: memref<1x4x8x32xf32, #tpu.memory_space<vmem>>, %arg3: memref<1x1x8x32xi32, #tpu.memory_space<vmem>>, %arg4: memref<4xf32, #tpu.memory_space<smem>>, %arg5: memref<1x1x8x32xf32, #tpu.memory_space<vmem>>) attributes {dimension_semantics = [#tpu.dimension_semantics<parallel>, #tpu.dimension_semantics<parallel>], iteration_bounds = array<i64: 2, 1>, scalar_prefetch = 0 : i64, scratch_operands = 0 : i64, tpu.core_type = #tpu.core_type<tc>, window_params = [{transform_indices = @transform_0, window_bounds = array<i64: 1, 4, 8, 32>}, {transform_indices = @transform_1, window_bounds = array<i64: 1, 1, 8, 32>}, {transform_indices = @transform_2, window_bounds = array<i64: 4>}, {transform_indices = @transform_3, window_bounds = array<i64: 1, 1, 8, 32>}]} {
    %c0 = arith.constant 0 : index
    %c0_0 = arith.constant 0 : index
    %c0_1 = arith.constant 0 : index
    %c0_2 = arith.constant 0 : index
    %0 = vector.load %arg3[%c0, %c0_0, %c0_1, %c0_2] : memref<1x1x8x32xi32, #tpu.memory_space<vmem>>, vector<1x1x8x32xi32>
    %1 = vector.shape_cast %0 : vector<1x1x8x32xi32> to vector<8x32xi32>
    %c0_3 = arith.constant 0 : index
    %c0_4 = arith.constant 0 : index
    %c0_5 = arith.constant 0 : index
    %c0_6 = arith.constant 0 : index
    %2 = vector.load %arg2[%c0_3, %c0_4, %c0_5, %c0_6] : memref<1x4x8x32xf32, #tpu.memory_space<vmem>>, vector<1x1x8x32xf32>
    %3 = vector.shape_cast %2 : vector<1x1x8x32xf32> to vector<8x32xf32>
    %c0_7 = arith.constant 0 : index
    %c1 = arith.constant 1 : index
    %c0_8 = arith.constant 0 : index
    %c0_9 = arith.constant 0 : index
    %4 = vector.load %arg2[%c0_7, %c1, %c0_8, %c0_9] : memref<1x4x8x32xf32, #tpu.memory_space<vmem>>, vector<1x1x8x32xf32>
    %5 = vector.shape_cast %4 : vector<1x1x8x32xf32> to vector<8x32xf32>
    %6 = arith.maximumf %3, %5 : vector<8x32xf32>
    %c0_10 = arith.constant 0 : index
    %c2 = arith.constant 2 : index
    %c0_11 = arith.constant 0 : index
    %c0_12 = arith.constant 0 : index
    %7 = vector.load %arg2[%c0_10, %c2, %c0_11, %c0_12] : memref<1x4x8x32xf32, #tpu.memory_space<vmem>>, vector<1x1x8x32xf32>
    %8 = vector.shape_cast %7 : vector<1x1x8x32xf32> to vector<8x32xf32>
    %9 = arith.maximumf %6, %8 : vector<8x32xf32>
    %c0_13 = arith.constant 0 : index
    %c3 = arith.constant 3 : index
    %c0_14 = arith.constant 0 : index
    %c0_15 = arith.constant 0 : index
    %10 = vector.load %arg2[%c0_13, %c3, %c0_14, %c0_15] : memref<1x4x8x32xf32, #tpu.memory_space<vmem>>, vector<1x1x8x32xf32>
    %11 = vector.shape_cast %10 : vector<1x1x8x32xf32> to vector<8x32xf32>
    %12 = arith.maximumf %9, %11 : vector<8x32xf32>
    %c0_16 = arith.constant 0 : index
    %c0_17 = arith.constant 0 : index
    %c0_18 = arith.constant 0 : index
    %c0_19 = arith.constant 0 : index
    %13 = vector.load %arg2[%c0_16, %c0_17, %c0_18, %c0_19] : memref<1x4x8x32xf32, #tpu.memory_space<vmem>>, vector<1x1x8x32xf32>
    %14 = vector.shape_cast %13 : vector<1x1x8x32xf32> to vector<8x32xf32>
    %c0_i32 = arith.constant 0 : i32
    %15 = vector.broadcast %c0_i32 : i32 to vector<8x32xi32>
    %16 = arith.cmpi eq, %1, %15 : vector<8x32xi32>
    %17 = arith.subf %14, %12 : vector<8x32xf32>
    %18 = math.exp %17 : vector<8x32xf32>
    %cst = arith.constant 0.000000e+00 : f32
    %19 = vector.broadcast %cst : f32 to vector<8x32xf32>
    %20 = arith.select %16, %14, %19 : vector<8x32xi1>, vector<8x32xf32>
    %c0_20 = arith.constant 0 : index
    %21 = memref.load %arg4[%c0_20] : memref<4xf32, #tpu.memory_space<smem>>
    %cst_21 = arith.constant 0.000000e+00 : f32
    %22 = vector.broadcast %21 : f32 to vector<8x32xf32>
    %23 = vector.broadcast %cst_21 : f32 to vector<8x32xf32>
    %24 = arith.select %16, %22, %23 : vector<8x32xi1>, vector<8x32xf32>
    %c0_22 = arith.constant 0 : index
    %c1_23 = arith.constant 1 : index
    %c0_24 = arith.constant 0 : index
    %c0_25 = arith.constant 0 : index
    %25 = vector.load %arg2[%c0_22, %c1_23, %c0_24, %c0_25] : memref<1x4x8x32xf32, #tpu.memory_space<vmem>>, vector<1x1x8x32xf32>
    %26 = vector.shape_cast %25 : vector<1x1x8x32xf32> to vector<8x32xf32>
    %27 = arith.subf %26, %12 : vector<8x32xf32>
    %28 = math.exp %27 : vector<8x32xf32>
    %29 = arith.addf %18, %28 : vector<8x32xf32>
    %c1_i32 = arith.constant 1 : i32
    %30 = vector.broadcast %c1_i32 : i32 to vector<8x32xi32>
    %31 = arith.cmpi eq, %1, %30 : vector<8x32xi32>
    %cst_26 = arith.constant 0.000000e+00 : f32
    %32 = vector.broadcast %cst_26 : f32 to vector<8x32xf32>
    %33 = arith.select %31, %26, %32 : vector<8x32xi1>, vector<8x32xf32>
    %34 = arith.addf %20, %33 : vector<8x32xf32>
    %c1_27 = arith.constant 1 : index
    %35 = memref.load %arg4[%c1_27] : memref<4xf32, #tpu.memory_space<smem>>
    %cst_28 = arith.constant 0.000000e+00 : f32
    %36 = vector.broadcast %35 : f32 to vector<8x32xf32>
    %37 = vector.broadcast %cst_28 : f32 to vector<8x32xf32>
    %38 = arith.select %31, %36, %37 : vector<8x32xi1>, vector<8x32xf32>
    %39 = arith.addf %24, %38 : vector<8x32xf32>
    %c0_29 = arith.constant 0 : index
    %c2_30 = arith.constant 2 : index
    %c0_31 = arith.constant 0 : index
    %c0_32 = arith.constant 0 : index
    %40 = vector.load %arg2[%c0_29, %c2_30, %c0_31, %c0_32] : memref<1x4x8x32xf32, #tpu.memory_space<vmem>>, vector<1x1x8x32xf32>
    %41 = vector.shape_cast %40 : vector<1x1x8x32xf32> to vector<8x32xf32>
    %42 = arith.subf %41, %12 : vector<8x32xf32>
    %43 = math.exp %42 : vector<8x32xf32>
    %44 = arith.addf %29, %43 : vector<8x32xf32>
    %c2_i32 = arith.constant 2 : i32
    %45 = vector.broadcast %c2_i32 : i32 to vector<8x32xi32>
    %46 = arith.cmpi eq, %1, %45 : vector<8x32xi32>
    %cst_33 = arith.constant 0.000000e+00 : f32
    %47 = vector.broadcast %cst_33 : f32 to vector<8x32xf32>
    %48 = arith.select %46, %41, %47 : vector<8x32xi1>, vector<8x32xf32>
    %49 = arith.addf %34, %48 : vector<8x32xf32>
    %c2_34 = arith.constant 2 : index
    %50 = memref.load %arg4[%c2_34] : memref<4xf32, #tpu.memory_space<smem>>
    %cst_35 = arith.constant 0.000000e+00 : f32
    %51 = vector.broadcast %50 : f32 to vector<8x32xf32>
    %52 = vector.broadcast %cst_35 : f32 to vector<8x32xf32>
    %53 = arith.select %46, %51, %52 : vector<8x32xi1>, vector<8x32xf32>
    %54 = arith.addf %39, %53 : vector<8x32xf32>
    %c0_36 = arith.constant 0 : index
    %c3_37 = arith.constant 3 : index
    %c0_38 = arith.constant 0 : index
    %c0_39 = arith.constant 0 : index
    %55 = vector.load %arg2[%c0_36, %c3_37, %c0_38, %c0_39] : memref<1x4x8x32xf32, #tpu.memory_space<vmem>>, vector<1x1x8x32xf32>
    %56 = vector.shape_cast %55 : vector<1x1x8x32xf32> to vector<8x32xf32>
    %57 = arith.subf %56, %12 : vector<8x32xf32>
    %58 = math.exp %57 : vector<8x32xf32>
    %59 = arith.addf %44, %58 : vector<8x32xf32>
    %c3_i32 = arith.constant 3 : i32
    %60 = vector.broadcast %c3_i32 : i32 to vector<8x32xi32>
    %61 = arith.cmpi eq, %1, %60 : vector<8x32xi32>
    %cst_40 = arith.constant 0.000000e+00 : f32
    %62 = vector.broadcast %cst_40 : f32 to vector<8x32xf32>
    %63 = arith.select %61, %56, %62 : vector<8x32xi1>, vector<8x32xf32>
    %64 = arith.addf %49, %63 : vector<8x32xf32>
    %c3_41 = arith.constant 3 : index
    %65 = memref.load %arg4[%c3_41] : memref<4xf32, #tpu.memory_space<smem>>
    %cst_42 = arith.constant 0.000000e+00 : f32
    %66 = vector.broadcast %65 : f32 to vector<8x32xf32>
    %67 = vector.broadcast %cst_42 : f32 to vector<8x32xf32>
    %68 = arith.select %61, %66, %67 : vector<8x32xi1>, vector<8x32xf32>
    %69 = arith.addf %54, %68 : vector<8x32xf32>
    %70 = math.log %59 : vector<8x32xf32>
    %71 = arith.addf %70, %12 : vector<8x32xf32>
    %72 = arith.subf %71, %64 : vector<8x32xf32>
    %73 = arith.mulf %69, %72 : vector<8x32xf32>
    %cst_43 = arith.constant 0.000000e+00 : f32
    %74 = vector.broadcast %cst_43 : f32 to vector<8x32xf32>
    %75 = arith.subf %74, %73 : vector<8x32xf32>
    %76 = math.exp %75 : vector<8x32xf32>
    %cst_44 = arith.constant 1.000000e+00 : f32
    %77 = vector.broadcast %cst_44 : f32 to vector<8x32xf32>
    %78 = arith.subf %77, %76 : vector<8x32xf32>
    %79 = arith.mulf %78, %78 : vector<8x32xf32>
    %80 = arith.mulf %79, %73 : vector<8x32xf32>
    %c0_45 = arith.constant 0 : index
    %c0_46 = arith.constant 0 : index
    %c0_47 = arith.constant 0 : index
    %c0_48 = arith.constant 0 : index
    %81 = vector.load %arg5[%c0_45, %c0_46, %c0_47, %c0_48] : memref<1x1x8x32xf32, #tpu.memory_space<vmem>>, vector<1x1x8x32xf32>
    %82 = vector.shape_cast %81 : vector<1x1x8x32xf32> to vector<8x32xf32>
    %83 = vector.shape_cast %80 : vector<8x32xf32> to vector<1x1x8x32xf32>
    tpu.vector_store %arg5[%c0_45, %c0_46, %c0_47, %c0_48], %83 {strides = array<i32>} : memref<1x1x8x32xf32, #tpu.memory_space<vmem>>, vector<1x1x8x32xf32>,
    return
  }
  func.func @transform_0(%arg0: i32, %arg1: i32) -> (i32, i32, i32, i32) {
    %c0_i32 = arith.constant 0 : i32
    %c0_i32_0 = arith.constant 0 : i32
    %c0_i32_1 = arith.constant 0 : i32
    return %arg0, %c0_i32, %c0_i32_0, %arg1 : i32, i32, i32, i32
  }
  func.func @transform_1(%arg0: i32, %arg1: i32) -> (i32, i32, i32, i32) {
    %c0_i32 = arith.constant 0 : i32
    %c0_i32_0 = arith.constant 0 : i32
    %c0_i32_1 = arith.constant 0 : i32
    return %arg0, %c0_i32, %c0_i32_0, %arg1 : i32, i32, i32, i32
  }
  func.func @transform_2(%arg0: i32, %arg1: i32) -> i32 {
    %c0_i32 = arith.constant 0 : i32
    %c0_i32_0 = arith.constant 0 : i32
    return %c0_i32 : i32
  }
  func.func @transform_3(%arg0: i32, %arg1: i32) -> (i32, i32, i32, i32) {
    %c0_i32 = arith.constant 0 : i32
    %c0_i32_0 = arith.constant 0 : i32
    %c0_i32_1 = arith.constant 0 : i32
    return %arg0, %arg1, %c0_i32, %c0_i32_0 : i32, i32, i32, i32
  }
}

</mosaic_0001>

<llo_original>
// kernel: tpu_custom_call.1
$region0: #{tpu_custom_call.1}
  #allocation0 [shape = 'u32[]', space=smem, size = 0x4, offset = 0x4, fixed_abs, tag = 'smem constant byte address 0x4 - core index']
  #allocation1 [shape = 'u32[72,128]{1,0:T(1,128)}', space=vmem, size = 0x9000, scoped, tag = 'internal scratch']
  %s0 = inlined_call_operand.hbm [shape: f32[2,4,8,32], index: 0, kind: input, shape index: {}]
  %s1 = inlined_call_operand.hbm [shape: s32[2,1,8,32], index: 1, kind: input, shape index: {}]
  %s2 = inlined_call_operand.vmem [shape: f32[4], index: 2, kind: input, shape index: {}]
  %s3 = inlined_call_operand.hbm [shape: f32[2,1,8,32], index: 3, kind: output, shape index: {}]
  %s4 = sld [smem:[#allocation0]]
  $region57: #{tpu_custom_call.1} parent=0
    _
  %s6 = ssub.s32 1, %s4
  %s7 = scalar_select 0, %s6, %s4
  $region1: #{tpu_custom_call.1} parent=0
    #allocation2 [shape = 'u8[32768]{0}', space=vmem, size = 0x8000, scoped, tag = 'input window, operand 0']
    #allocation3 [shape = 's32[2]{0}', space=sflag, size = 0x8, scoped, tag = 'scoped memory for tpu_custom_call.1']
    #allocation4 [shape = 's32[2]{0}', space=sflag, size = 0x8, scoped, tag = 'scoped memory for tpu_custom_call.1']
    #allocation5 [shape = 's32[2]{0}', space=sflag, size = 0x8, scoped, tag = 'scoped memory for tpu_custom_call.1']
    #allocation6 [shape = 'u8[8192]{0}', space=vmem, size = 0x2000, scoped, tag = 'input window, operand 1']
    #allocation7 [shape = 's32[2]{0}', space=sflag, size = 0x8, scoped, tag = 'scoped memory for tpu_custom_call.1']
    #allocation8 [shape = 'u8[512]{0}', space=smem, size = 0x200, scoped, tag = 'input window, operand 2, single buffered']
    #allocation9 [shape = 'u8[8192]{0}', space=vmem, size = 0x2000, scoped, tag = 'output window, operand 0']
    %8 = vsyncpa [#allocation3], 0
    %s9 = scalar_lea.sflag [#allocation3], 1
    %10 = vsyncpa %s9, 0
    %11 = vsyncpa [#allocation7], 0
    %s12 = scalar_lea.sflag [#allocation7], 1
    %13 = vsyncpa %s12, 0
    %14 = vsyncpa [#allocation5], 0
    %15 = vsyncpa [#allocation4], 0
    %s16 = scalar_lea.sflag [#allocation4], 1
    %17 = vsyncpa %s16, 0
    loop: start=0, step=1, limit=4
    $region2: #{tpu_custom_call.1} parent=1 // loop_pre_header
      _
    $region3: #{tpu_custom_call.1} parent=1 // loop_header
      %s19 = sphi 0, %s23
      %p20 = scmp.ge.s32.totalorder %s19, 4
      %s26 = sphi 0, %s38
      %s27 = sphi 0, %s34
      %s28 = sphi 0, %s26
      %s29 = sphi 0, %s27
      %s30 = sphi 0, %s28
      %s31 = sphi 0, %s29
      %s43 = sphi 0, %s45
      %s46 = sphi 0, %s43
      %s47 = sphi 0, %s46
      %s63 = sphi 0, %s47
      %s71 = sphi 0, %s73
      %s74 = sphi 0, %s71
      %s75 = sphi 0, %s74
      %s91 = sphi 0, %s75
      %s95 = sphi 0, %s95
      %s97 = sphi 0, %s95
      %s98 = sphi 0, %s97
      %s112 = sphi 0, %s98
      %s120 = sphi 0, %s122
      %s123 = sphi 0, %s120
      %s124 = sphi 0, %s123
      %s140 = sphi 0, %s124
    $region4: #{tpu_custom_call.1} parent=1 // loop_header_branch
      %22 = sbr.rel (%p20) target = $region8
    $region5: #{tpu_custom_call.1} parent=1 // loop_body
      %s24 = ssub.s32 %s19, 1
      %s25 = ssub.s32 %s19, 2
      %s32 = sadd.s32 1, %s27
      %p33 = scmp.ge.s32.totalorder %s32, 1
      %s34 = scalar_select %p33, 0, %s32
      %s35 = sadd.s32 1, %s26
      %s36 = scalar_select %p33, %s35, %s26
      %p37 = scmp.ge.s32.totalorder %s36, 2
      %s38 = scalar_select %p37, 0, %s36
      %s39 = ssub.s32 %s26, %s38
      %s40 = ssub.s32 %s27, %s34
      %s41 = sor.u32 %s39, %s40
      %p42 = scmp.eq.s32.totalorder %s41, 0
      %s44 = sadd.s32 %s43, 1
      %s45 = scalar_select %p42, %s43, %s44
      %p48 = pneg %p42
      %p49 = scmp.eq.s32.totalorder %s19, 1
      %p50 = por %p48, %p49
      %p51 = scmp.ne.s32.totalorder %s43, %s46
      %p52 = scmp.eq.s32.totalorder %s19, 0
      %p53 = por %p51, %p52
      %p54 = scmp.ne.s32.totalorder %s43, %s46
      %p55 = scmp.eq.s32.totalorder %s24, 1
      %p56 = por %p54, %p55
      %p57 = scmp.ne.s32.totalorder %s46, %s47
      %p58 = scmp.eq.s32.totalorder %s24, 0
      %p59 = por %p57, %p58
      %p60 = scmp.ne.s32.totalorder %s46, %s47
      %p61 = scmp.eq.s32.totalorder %s25, 1
      %p62 = por %p60, %p61
      %p64 = scmp.ne.s32.totalorder %s47, %s63
      %p65 = scmp.eq.s32.totalorder %s25, 0
      %p66 = por %p64, %p65
      %s67 = ssub.s32 %s26, %s38
      %s68 = ssub.s32 %s27, %s34
      %s69 = sor.u32 %s67, %s68
      %p70 = scmp.eq.s32.totalorder %s69, 0
      %s72 = sadd.s32 %s71, 1
      %s73 = scalar_select %p70, %s71, %s72
      %p76 = pneg %p70
      %p77 = scmp.eq.s32.totalorder %s19, 1
      %p78 = por %p76, %p77
      %p79 = scmp.ne.s32.totalorder %s71, %s74
      %p80 = scmp.eq.s32.totalorder %s19, 0
      %p81 = por %p79, %p80
      %p82 = scmp.ne.s32.totalorder %s71, %s74
      %p83 = scmp.eq.s32.totalorder %s24, 1
      %p84 = por %p82, %p83
      %p85 = scmp.ne.s32.totalorder %s74, %s75
      %p86 = scmp.eq.s32.totalorder %s24, 0
      %p87 = por %p85, %p86
      %p88 = scmp.ne.s32.totalorder %s74, %s75
      %p89 = scmp.eq.s32.totalorder %s25, 1
      %p90 = por %p88, %p89
      %p92 = scmp.ne.s32.totalorder %s75, %s91
      %p93 = scmp.eq.s32.totalorder %s25, 0
      %p94 = por %p92, %p93
      %s96 = sadd.s32 %s95, 1
      %p99 = scmp.eq.s32.totalorder %s19, 1
      %p100 = scmp.ne.s32.totalorder %s95, %s97
      %p101 = scmp.eq.s32.totalorder %s19, 0
      %p102 = por %p100, %p101
      %p103 = scmp.ne.s32.totalorder %s95, %s97
      %p104 = scmp.eq.s32.totalorder %s24, 1
      %p105 = por %p103, %p104
      %p106 = scmp.ne.s32.totalorder %s97, %s98
      %p107 = scmp.eq.s32.totalorder %s24, 0
      %p108 = por %p106, %p107
      %p109 = scmp.ne.s32.totalorder %s97, %s98
      %p110 = scmp.eq.s32.totalorder %s25, 1
      %p111 = por %p109, %p110
      %p113 = scmp.ne.s32.totalorder %s98, %s112
      %p114 = scmp.eq.s32.totalorder %s25, 0
      %p115 = por %p113, %p114
      %s116 = ssub.s32 %s26, %s38
      %s117 = ssub.s32 %s27, %s34
      %s118 = sor.u32 %s116, %s117
      %p119 = scmp.eq.s32.totalorder %s118, 0
      %s121 = sadd.s32 %s120, 1
      %s122 = scalar_select %p119, %s120, %s121
      %p125 = pneg %p119
      %p126 = scmp.eq.s32.totalorder %s19, 1
      %p127 = por %p125, %p126
      %p128 = scmp.ne.s32.totalorder %s120, %s123
      %p129 = scmp.eq.s32.totalorder %s19, 0
      %p130 = por %p128, %p129
      %p131 = scmp.ne.s32.totalorder %s120, %s123
      %p132 = scmp.eq.s32.totalorder %s24, 1
      %p133 = por %p131, %p132
      %p134 = scmp.ne.s32.totalorder %s123, %s124
      %p135 = scmp.eq.s32.totalorder %s24, 0
      %p136 = por %p134, %p135
      %p137 = scmp.ne.s32.totalorder %s123, %s124
      %p138 = scmp.eq.s32.totalorder %s25, 1
      %p139 = por %p137, %p138
      %p141 = scmp.ne.s32.totalorder %s124, %s140
      %p142 = scmp.eq.s32.totalorder %s25, 0
      %p143 = por %p141, %p142
      %p144 = scmp.le.s32.totalorder 1, %s19
      %p145 = scmp.lt.s32.totalorder %s19, 3
      %p146 = pnand %p144, %p145
      %p147 = pneg %p146
      // Predicated region
      $region9: #{tpu_custom_call.1} parent=5 // pred_check
        _
      $region10: #{tpu_custom_call.1} parent=5 // pred_check_branch
        %149 = sbr.rel (%p146) target = $region12
      $region11: #{tpu_custom_call.1} parent=5 // pred_region
        %s150 = ssub.s32 %s19, 1
        // Predicated region
        $region13: #{tpu_custom_call.1} parent=11 // pred_check
          %p151 = pneg %p108
        $region14: #{tpu_custom_call.1} parent=11 // pred_check_branch
          %153 = sbr.rel (%p151) target = $region16
        $region15: #{tpu_custom_call.1} parent=11 // pred_region
          %155 = vsyncadd [#allocation5], 0
          %s157 = sshll.u32 %s2, 4
          %s158 = int_to_ptr.vmem [resolvable:$true] %s157
          %160 = dma.vmem_to_smem %s158, 16, [#allocation8], [#allocation5]
        $region16: #{tpu_custom_call.1} parent=11 // pred_fallthru
          _
      $region12: #{tpu_custom_call.1} parent=5 // pred_fallthru
        _
      %p161 = scmp.lt.s32.totalorder %s19, 2
      // Predicated region
      $region17: #{tpu_custom_call.1} parent=5 // pred_check
        %p162 = pneg %p161
      $region18: #{tpu_custom_call.1} parent=5 // pred_check_branch
        %164 = sbr.rel (%p162) target = $region20
      $region19: #{tpu_custom_call.1} parent=5 // pred_region
        // Predicated region
        $region21: #{tpu_custom_call.1} parent=19 // pred_check
          %p165 = pneg %p53
        $region22: #{tpu_custom_call.1} parent=19 // pred_check_branch
          %167 = sbr.rel (%p165) target = $region24
        $region23: #{tpu_custom_call.1} parent=19 // pred_region
          %s168 = sand.u32 %s43, 1
          %s169 = scalar_lea.sflag [#allocation3], %s168
          %s170 = sand.u32 %s43, 1
          %s171 = smul.addr %s170, 32
          %s172 = scalar_lea.vmem [#allocation2], %s171
          %174 = vsyncadd %s169, 0
          %s175 = smul.addr %s26, 4
          %s176 = sadd.s32 %s27, %s175
          %s177 = smul.addr %s176, 8
          %s178 = scalar_lea.hbm %s0, %s177
          %s179 = sshll.u32 %s178, 4
          %s180 = int_to_ptr.hbm [resolvable:$true] %s179
          %s181 = sshll.u32 %s172, 4
          %s182 = int_to_ptr.vmem [resolvable:$true] %s181
          %187 = dma.hbm_to_vmem [thread:$0]  %s180, 512, %s182, %s169, 128, 128, 8
        $region24: #{tpu_custom_call.1} parent=19 // pred_fallthru
          _
        // Predicated region
        $region25: #{tpu_custom_call.1} parent=19 // pred_check
          %p188 = pneg %p81
        $region26: #{tpu_custom_call.1} parent=19 // pred_check_branch
          %190 = sbr.rel (%p188) target = $region28
        $region27: #{tpu_custom_call.1} parent=19 // pred_region
          %s191 = sand.u32 %s71, 1
          %s192 = scalar_lea.sflag [#allocation7], %s191
          %s193 = sand.u32 %s71, 1
          %s194 = smul.addr %s193, 8
          %s195 = scalar_lea.vmem [#allocation6], %s194
          %197 = vsyncadd %s192, 0
          %s198 = sadd.s32 %s27, %s26
          %s199 = smul.addr %s198, 8
          %s200 = scalar_lea.hbm %s1, %s199
          %s202 = sshll.u32 %s200, 4
          %s203 = int_to_ptr.hbm [resolvable:$true] %s202
          %s204 = sshll.u32 %s195, 4
          %s205 = int_to_ptr.vmem [resolvable:$true] %s204
          %207 = dma.hbm_to_vmem [thread:$0]  %s203, 128, %s205, %s192
        $region28: #{tpu_custom_call.1} parent=19 // pred_fallthru
          _
      $region20: #{tpu_custom_call.1} parent=5 // pred_fallthru
        _
      %p208 = scmp.le.s32.totalorder 1, %s19
      %p209 = scmp.lt.s32.totalorder %s19, 3
      %p210 = pnand %p208, %p209
      %p211 = pneg %p210
      // Predicated region
      $region29: #{tpu_custom_call.1} parent=5 // pred_check
        _
      $region30: #{tpu_custom_call.1} parent=5 // pred_check_branch
        %213 = sbr.rel (%p210) target = $region32
      $region31: #{tpu_custom_call.1} parent=5 // pred_region
        %s214 = ssub.s32 %s19, 1
        %s215 = sand.u32 %s46, 1
        %s216 = scalar_lea.sflag [#allocation3], %s215
        %s217 = sand.u32 %s46, 1
        %s218 = smul.addr %s217, 32
        %s219 = scalar_lea.vmem [#allocation2], %s218
        // Predicated region
        $region33: #{tpu_custom_call.1} parent=31 // pred_check
          %p220 = pneg %p59
        $region34: #{tpu_custom_call.1} parent=31 // pred_check_branch
          %222 = sbr.rel (%p220) target = $region36
        $region35: #{tpu_custom_call.1} parent=31 // pred_region
          %224 = dma.done %s216, 512
        $region36: #{tpu_custom_call.1} parent=31 // pred_fallthru
          _
        %s225 = sand.u32 %s74, 1
        %s226 = scalar_lea.sflag [#allocation7], %s225
        %s227 = sand.u32 %s74, 1
        %s228 = smul.addr %s227, 8
        %s229 = scalar_lea.vmem [#allocation6], %s228
        // Predicated region
        $region37: #{tpu_custom_call.1} parent=31 // pred_check
          %p230 = pneg %p87
        $region38: #{tpu_custom_call.1} parent=31 // pred_check_branch
          %232 = sbr.rel (%p230) target = $region40
        $region39: #{tpu_custom_call.1} parent=31 // pred_region
          %234 = dma.done %s226, 128
        $region40: #{tpu_custom_call.1} parent=31 // pred_fallthru
          _
        // Predicated region
        $region41: #{tpu_custom_call.1} parent=31 // pred_check
          %p235 = pneg %p108
        $region42: #{tpu_custom_call.1} parent=31 // pred_check_branch
          %237 = sbr.rel (%p235) target = $region44
        $region43: #{tpu_custom_call.1} parent=31 // pred_region
          %239 = dma.done [#allocation5], 16
        $region44: #{tpu_custom_call.1} parent=31 // pred_fallthru
          _
        %240 = sfence
        %s241 = sand.u32 %s46, 1
        %s242 = scalar_lea.sflag [#allocation3], %s241
        %s243 = sand.u32 %s46, 1
        %s244 = smul.addr %s243, 32
        %s245 = scalar_lea.vmem [#allocation2], %s244
        %p246 = pneg %p59
        %p247 = pneg %p56
        %s248 = sand.u32 %s74, 1
        %s249 = scalar_lea.sflag [#allocation7], %s248
        %s250 = sand.u32 %s74, 1
        %s251 = smul.addr %s250, 8
        %s252 = scalar_lea.vmem [#allocation6], %s251
        %p253 = pneg %p87
        %p254 = pneg %p84
        %p255 = pneg %p108
        %p256 = pneg %p105
        %p257 = pneg %p136
        %p258 = pneg %p133
        %s259 = sand.u32 %s123, 1
        %s260 = scalar_lea.sflag [#allocation4], %s259
        %s261 = sand.u32 %s123, 1
        %s262 = smul.addr %s261, 8
        %s263 = scalar_lea.vmem [#allocation9], %s262
        %v264 = vld [vmem:[%s229] sm:$0xff]
        %v265 = vld [vmem:[%s219] sm:$0xff]
        %s266 = scalar_lea.vmem %s219, 8 [#allocation2]
        %v267 = vld [vmem:[%s266] sm:$0xff]
        %v268 = vmax.f32 %v265, %v267
        %s269 = scalar_lea.vmem %s219, 16 [#allocation2]
        %v270 = vld [vmem:[%s269] sm:$0xff]
        %v271 = vmax.f32 %v268, %v270
        %s272 = scalar_lea.vmem %s219, 24 [#allocation2]
        %v273 = vld [vmem:[%s272] sm:$0xff]
        %v274 = vmax.f32 %v271, %v273
        %vm275 = vcmp.eq.s32.totalorder %v264, 0
        %v276 = vsub.f32 %v265, %v274
        %v277 = vmul.f32 %v276, 1.442695
        %v278 = vpow.pop %v277
        %v279 = vsel %vm275, %v265, 0.0
        %s280 = sld [smem:[#allocation8]]
        %v281 = vstv %s280
        %v282 = vsel %vm275, %v281, 0.0
        %v283 = vsub.f32 %v267, %v274
        %v284 = vmul.f32 %v283, 1.442695
        %v285 = vpow.pop %v284
        %v286 = vadd.f32 %v278, %v285
        %vm287 = vcmp.eq.s32.totalorder %v264, 1
        %v288 = vsel %vm287, %v267, 0.0
        %v289 = vadd.f32 %v279, %v288
        %s290 = sld [smem:[#allocation8 + $0x1]]
        %v291 = vstv %s290
        %v292 = vsel %vm287, %v291, 0.0
        %v293 = vadd.f32 %v282, %v292
        %v294 = vsub.f32 %v270, %v274
        %v295 = vmul.f32 %v294, 1.442695
        %v296 = vpow.pop %v295
        %v297 = vadd.f32 %v286, %v296
        %vm298 = vcmp.eq.s32.totalorder %v264, 2
        %v299 = vsel %vm298, %v270, 0.0
        %v300 = vadd.f32 %v289, %v299
        %s301 = sld [smem:[#allocation8 + $0x2]]
        %v302 = vstv %s301
        %v303 = vsel %vm298, %v302, 0.0
        %v304 = vadd.f32 %v293, %v303
        %v305 = vsub.f32 %v273, %v274
        %v306 = vmul.f32 %v305, 1.442695
        %v307 = vpow.pop %v306
        %v308 = vadd.f32 %v297, %v307
        %vm309 = vcmp.eq.s32.totalorder %v264, 3
        %v310 = vsel %vm309, %v273, 0.0
        %v311 = vadd.f32 %v300, %v310
        %s312 = sld [smem:[#allocation8 + $0x3]]
        %v313 = vstv %s312
        %v314 = vsel %vm309, %v313, 0.0
        %v315 = vadd.f32 %v304, %v314
        %v316 = vlog2.pop %v308
        %v317 = vmul.f32 %v316, 0.6931472
        %v318 = vadd.f32 %v317, %v274
        %v319 = vsub.f32 %v318, %v311
        %v320 = vmul.f32 %v315, %v319
        %v321 = vsub.f32 0.0, %v320
        %v322 = vmul.f32 %v321, 1.442695
        %v323 = vpow.pop %v322
        %v324 = vsub.f32 1.0, %v323
        %v325 = vmul.f32 %v324, %v324
        %v326 = vmul.f32 %v325, %v320
        %vm327 = vcmask 261120
        %328 = vst.msk [vmem:[%s263] sm:$0xff] %vm327, %v326
        %s329 = sand.u32 %s123, 1
        %s330 = scalar_lea.sflag [#allocation4], %s329
        %s331 = sand.u32 %s123, 1
        %s332 = smul.addr %s331, 8
        %s333 = scalar_lea.vmem [#allocation9], %s332
        // Predicated region
        $region45: #{tpu_custom_call.1} parent=31 // pred_check
          %p334 = pneg %p133
        $region46: #{tpu_custom_call.1} parent=31 // pred_check_branch
          %336 = sbr.rel (%p334) target = $region48
        $region47: #{tpu_custom_call.1} parent=31 // pred_region
          %338 = vsyncadd %s330, 0
          %s339 = sadd.s32 %s29, %s28
          %s340 = smul.addr %s339, 8
          %s341 = scalar_lea.hbm %s3, %s340
          %s343 = sshll.u32 %s333, 4
          %s344 = int_to_ptr.vmem [resolvable:$true] %s343
          %s345 = sshll.u32 %s341, 4
          %s346 = int_to_ptr.hbm [resolvable:$true] %s345
          %348 = dma.vmem_to_hbm [thread:$0]  %s344, 128, %s346, %s330
        $region48: #{tpu_custom_call.1} parent=31 // pred_fallthru
          _
      $region32: #{tpu_custom_call.1} parent=5 // pred_fallthru
        _
      %p349 = scmp.le.s32.totalorder 2, %s19
      // Predicated region
      $region49: #{tpu_custom_call.1} parent=5 // pred_check
        %p350 = pneg %p349
      $region50: #{tpu_custom_call.1} parent=5 // pred_check_branch
        %352 = sbr.rel (%p350) target = $region52
      $region51: #{tpu_custom_call.1} parent=5 // pred_region
        %s353 = ssub.s32 %s19, 2
        // Predicated region
        $region53: #{tpu_custom_call.1} parent=51 // pred_check
          %p354 = pneg %p139
        $region54: #{tpu_custom_call.1} parent=51 // pred_check_branch
          %356 = sbr.rel (%p354) target = $region56
        $region55: #{tpu_custom_call.1} parent=51 // pred_region
          %s357 = sand.u32 %s124, 1
          %s358 = scalar_lea.sflag [#allocation4], %s357
          %s359 = sand.u32 %s124, 1
          %s360 = smul.addr %s359, 8
          %s361 = scalar_lea.vmem [#allocation9], %s360
          %363 = dma.done %s358, 128
        $region56: #{tpu_custom_call.1} parent=51 // pred_fallthru
          _
      $region52: #{tpu_custom_call.1} parent=5 // pred_fallthru
        _
    $region6: #{tpu_custom_call.1} parent=1 // loop_footer
      %s23 = sadd.s32 1, %s19
    $region7: #{tpu_custom_call.1} parent=1 // loop_footer_branch
      %18 = sbr.rel target = $region3
    $region8: #{tpu_custom_call.1} parent=1 // loop_exit
      _
    %364 = vsyncpa [#allocation3], 1
    %s365 = scalar_lea.sflag [#allocation3], 1
    %366 = vsyncpa %s365, 1
    %367 = vsyncpa [#allocation7], 1
    %s368 = scalar_lea.sflag [#allocation7], 1
    %369 = vsyncpa %s368, 1
    %370 = vsyncpa [#allocation4], 1
    %s371 = scalar_lea.sflag [#allocation4], 1
    %372 = vsyncpa %s371, 1
    %373 = vsyncpa [#allocation5], 1
    %s374 = scalar_lea.sflag [#allocation5], 1
    %375 = vsyncpa %s374, 1

</llo_original>
